<compile_context>
chip_gen: v5e
topology: v5e:2x2
jax: 0.10.0
libtpu: 0.0.40
codegen_flags: <defaults>
</compile_context>

<pallas_src>
import math

import jax
import jax.numpy as jnp
from jax.experimental import pallas as pl
from jax.experimental.pallas import tpu as pltpu


# ----------------------------------------------------------------------------
# Fixed sinusoidal table (trace-time constant; mirrors the torch __init__).
# ----------------------------------------------------------------------------
def fixed_embedding_table(c_in: int, d_model: int, dtype=jnp.float32):
    position = jnp.arange(c_in, dtype=jnp.float32)[:, None]               # (c_in, 1)
    div_term = jnp.exp(
        jnp.arange(0, d_model, 2, dtype=jnp.float32) * -(math.log(10000.0) / d_model)
    )                                                                     # (ceil(d/2),)
    sin = jnp.sin(position * div_term)
    cos = jnp.cos(position * div_term)
    w = jnp.zeros((c_in, d_model), jnp.float32)
    w = w.at[:, 0::2].set(sin)
    w = w.at[:, 1::2].set(cos[:, : d_model // 2])                         # odd d_model safe
    return w.astype(dtype)


def _round_up(a: int, m: int) -> int:
    return -(-a // m) * m


# ----------------------------------------------------------------------------
# Kernel: one token tile per grid step, gather-as-one-hot-matmul on the MXU.
# ----------------------------------------------------------------------------
def _embed_lookup_kernel(idx_ref, tbl_ref, o_ref):
    # idx_ref: (tile, 1)      int32 indices
    # tbl_ref: (c_in, d_pad)  embedding table (resident: constant block index)
    # o_ref  : (tile, d_pad)  lane-dense output slab
    tile = o_ref.shape[0]
    c_in = tbl_ref.shape[0]
    idx = jnp.clip(idx_ref[...], 0, c_in - 1)                             # jnp.take-style clip
    col = jax.lax.broadcasted_iota(jnp.int32, (tile, c_in), 1)            # (tile, c_in)
    onehot = (col == idx).astype(tbl_ref.dtype)                           # gather as matmul
    o_ref[...] = jnp.dot(
        onehot, tbl_ref[...], preferred_element_type=jnp.float32
    ).astype(o_ref.dtype)


def fixed_embedding(x, table, *, tile_t: int = 1024):
    """FixedEmbedding forward.

    x     : integer indices, any shape, values in [0, c_in)
    table : (c_in, d_model) fixed embedding table (f32 or bf16)
    returns x.shape + (d_model,) with dtype == table.dtype
    """
    c_in, d_model = table.shape
    out_dtype = table.dtype
    itemsize = jnp.dtype(out_dtype).itemsize

    # ---- lane-dense feature axis (unmasked stores, full MXU N) ---------------
    d_pad = _round_up(d_model, 128)
    table_p = table if d_pad == d_model else jnp.pad(table, ((0, 0), (0, d_pad - d_model)))

    # ---- flatten token axis --------------------------------------------------
    orig_shape = x.shape
    idx = x.reshape(-1).astype(jnp.int32)
    n_tok = int(idx.shape[0])

    # ---- token-tile selection ------------------------------------------------
    tile_t = max(8, (int(tile_t) // 8) * 8)              # sublane rule: multiple of 8
    tile = min(tile_t, _round_up(n_tok, 8))
    if tile >= 16 and pl.cdiv(n_tok, tile) < 2:          # v7x: give both TCs a tile
        tile = _round_up(pl.cdiv(n_tok, 2), 8)
    n_grid = pl.cdiv(n_tok, tile)

    # Only the cheap int32 index array is padded; the (n_tok, d_pad) output is
    # written directly (Pallas masks the ragged last block) -> no extra HBM
    # read+write pass over the large output.
    n_pad = n_grid * tile
    idx_p = jnp.pad(idx, (0, n_pad - n_tok)).reshape(n_pad, 1)

    # ---- VMEM budget / scheduler hint ---------------------------------------
    c_in_l = _round_up(c_in, 128)
    vmem_needed = (
        2 * tile * d_pad * itemsize                       # output double buffer
        + 2 * tile * 128 * 4                              # (tile,1) idx blocks, lane padded
        + 2 * _round_up(c_in, 8) * d_pad * itemsize       # table buffers (fetched once)
        + 3 * tile * c_in_l * 4                           # iota / compare / one-hot temps
    )
    vmem_limit = int(min(max(vmem_needed + (8 << 20), 32 << 20), 100 << 20))

    cost = pl.CostEstimate(
        flops=2 * n_pad * c_in * d_pad,
        transcendentals=0,
        bytes_accessed=idx_p.size * 4 + table_p.size * itemsize + n_tok * d_pad * itemsize,
    )

    out = pl.pallas_call(
        _embed_lookup_kernel,
        out_shape=jax.ShapeDtypeStruct((n_tok, d_pad), out_dtype),
        grid_spec=pltpu.PrefetchScalarGridSpec(
            num_scalar_prefetch=0,
            grid=(n_grid,),
            in_specs=[
                # Per-tile indices: (tile, 1) — tiny, sublane-aligned.
                pl.BlockSpec((tile, 1), lambda t: (t, 0)),
                # Full table every step (constant block index -> resident).
                pl.BlockSpec((c_in, d_pad), lambda t: (0, 0)),
            ],
            out_specs=pl.BlockSpec((tile, d_pad), lambda t: (t, 0)),
        ),
        compiler_params=pltpu.CompilerParams(
            dimension_semantics=("parallel",),            # token tiles across TCs on v7x
            vmem_limit_bytes=vmem_limit,
        ),
        cost_estimate=cost,
    )(idx_p, table_p)

    if d_pad != d_model:
        out = out[:, :d_model]                            # only taken for small/odd d_model
    return out.reshape(*orig_shape, d_model)


# ----------------------------------------------------------------------------
# Pure-JAX reference.
# ----------------------------------------------------------------------------
def _reference(x, table):
    return jnp.take(table, x.astype(jnp.int32), axis=0)


if __name__ == "__main__":
    B, L, c_in, d_model = 2, 8, 4, 32

    key = jax.random.PRNGKey(0)
    x = jax.random.randint(key, (B, L), 0, c_in, dtype=jnp.int32)

    # f32 table (matches the torch module exactly).
    table = fixed_embedding_table(c_in, d_model)
    y = jax.block_until_ready(fixed_embedding(x, table))
    assert y.shape == (B, L, d_model), y.shape
    assert jnp.allclose(y, _reference(x, table), atol=1e-6, rtol=1e-6), "f32 mismatch"

    # Non-2D index shape (torch module accepts any index shape); exercises the
    # ragged-last-block output path (n_tok = 30 not a multiple of the tile).
    x3 = jax.random.randint(jax.random.PRNGKey(1), (3, 2, 5), 0, c_in, dtype=jnp.int32)
    y3 = jax.block_until_ready(fixed_embedding(x3, table))
    assert y3.shape == (3, 2, 5, d_model), y3.shape
    assert jnp.allclose(y3, _reference(x3, table), atol=1e-6, rtol=1e-6), "3-D mismatch"

    # bf16 table/output path (halves HBM write traffic, native bf16 MXU path).
    tbl_bf16 = fixed_embedding_table(c_in, d_model, dtype=jnp.bfloat16)
    yb = jax.block_until_ready(fixed_embedding(x, tbl_bf16))
    assert yb.dtype == jnp.bfloat16
    assert jnp.allclose(
        yb.astype(jnp.float32),
        _reference(x, tbl_bf16).astype(jnp.float32),
        atol=1e-2, rtol=1e-2,
    ), "bf16 mismatch"

    print("KERNEL_OK")
</pallas_src>

<mosaic_0001>
module attributes {stable_mosaic.version = 11 : i64} {
  func.func @_embed_lookup_kernel(%arg0: i32, %arg1: memref<8x1xi32, #tpu.memory_space<vmem>>, %arg2: memref<4x128xf32, #tpu.memory_space<vmem>>, %arg3: memref<8x128xf32, #tpu.memory_space<vmem>>) attributes {dimension_semantics = [#tpu.dimension_semantics<parallel>], iteration_bounds = array<i64: 2>, scalar_prefetch = 0 : i64, scratch_operands = 0 : i64, tpu.core_type = #tpu.core_type<tc>, window_params = [{transform_indices = @transform_0, window_bounds = array<i64: 8, 1>}, {pipeline_mode = #tpu.pipeline_mode<synchronous>, transform_indices = @transform_1, window_bounds = array<i64: 4, 128>}, {transform_indices = @transform_2, window_bounds = array<i64: 8, 128>}]} {
    %c0 = arith.constant 0 : index
    %c0_0 = arith.constant 0 : index
    %0 = vector.load %arg1[%c0, %c0_0] : memref<8x1xi32, #tpu.memory_space<vmem>>, vector<8x1xi32>
    %c0_i32 = arith.constant 0 : i32
    %c3_i32 = arith.constant 3 : i32
    %1 = vector.broadcast %c0_i32 : i32 to vector<8x1xi32>
    %2 = arith.maxsi %1, %0 : vector<8x1xi32>
    %3 = vector.broadcast %c3_i32 : i32 to vector<8x1xi32>
    %4 = arith.minsi %3, %2 : vector<8x1xi32>
    %5 = tpu.iota {dimensions = array<i32: 1>} : vector<8x4xi32>
    %6 = vector.broadcast %4 : vector<8x1xi32> to vector<8x4xi32>
    %7 = arith.cmpi eq, %5, %6 : vector<8x4xi32>
    %8 = arith.extui %7 : vector<8x4xi1> to vector<8x4xi32>
    %9 = arith.sitofp %8 : vector<8x4xi32> to vector<8x4xf32>
    %c0_1 = arith.constant 0 : index
    %c0_2 = arith.constant 0 : index
    %10 = vector.load %arg2[%c0_1, %c0_2] : memref<4x128xf32, #tpu.memory_space<vmem>>, vector<4x128xf32>
    %cst = arith.constant dense<0.000000e+00> : vector<8x128xf32>
    %11 = tpu.matmul %9, %10, %cst {dimension_numbers = #tpu.dot_dimension_numbers<[1], [0], [0], [1], [0, 0, 1, 1], [], []>} : vector<8x4xf32>, vector<4x128xf32>, vector<8x128xf32> -> vector<8x128xf32>
    %c0_3 = arith.constant 0 : index
    %c0_4 = arith.constant 0 : index
    %12 = vector.load %arg3[%c0_3, %c0_4] : memref<8x128xf32, #tpu.memory_space<vmem>>, vector<8x128xf32>
    tpu.vector_store %arg3[%c0_3, %c0_4], %11 {strides = array<i32>} : memref<8x128xf32, #tpu.memory_space<vmem>>, vector<8x128xf32>,
    return
  }
  func.func @transform_0(%arg0: i32) -> (i32, i32) {
    %c0_i32 = arith.constant 0 : i32
    %c0_i32_0 = arith.constant 0 : i32
    return %arg0, %c0_i32 : i32, i32
  }
  func.func @transform_1(%arg0: i32) -> (i32, i32) {
    %c0_i32 = arith.constant 0 : i32
    %c0_i32_0 = arith.constant 0 : i32
    %c0_i32_1 = arith.constant 0 : i32
    return %c0_i32, %c0_i32_0 : i32, i32
  }
  func.func @transform_2(%arg0: i32) -> (i32, i32) {
    %c0_i32 = arith.constant 0 : i32
    %c0_i32_0 = arith.constant 0 : i32
    return %arg0, %c0_i32 : i32, i32
  }
}

</mosaic_0001>

<llo_original>
// kernel: tpu_custom_call.1
$region0: #{tpu_custom_call.1}
  #allocation0 [shape = 'u32[]', space=smem, size = 0x4, offset = 0x4, fixed_abs, tag = 'smem constant byte address 0x4 - core index']
  #allocation1 [shape = 'u32[72,128]{1,0:T(1,128)}', space=vmem, size = 0x9000, scoped, tag = 'internal scratch']
  %s0 = inlined_call_operand.vmem [shape: s32[16,1], index: 0, kind: input, shape index: {}]
  %s1 = inlined_call_operand.vmem [shape: f32[4,128], index: 1, kind: input, shape index: {}]
  %s2 = inlined_call_operand.hbm [shape: f32[16,128], index: 2, kind: output, shape index: {}]
  %s3 = sld [smem:[#allocation0]]
  $region41: #{tpu_custom_call.1} parent=0
    _
  %s5 = ssub.s32 1, %s3
  %s6 = scalar_select 0, %s5, %s3
  $region1: #{tpu_custom_call.1} parent=0
    #allocation2 [shape = 'u8[8192]{0}', space=vmem, size = 0x2000, scoped, tag = 'output window, operand 0']
    #allocation3 [shape = 's32[2]{0}', space=sflag, size = 0x8, scoped, tag = 'scoped memory for tpu_custom_call.1']
    %7 = vsyncpa [#allocation3], 0
    %s8 = scalar_lea.sflag [#allocation3], 1
    %9 = vsyncpa %s8, 0
    loop: start=0, step=1, limit=4
    $region2: #{tpu_custom_call.1} parent=1 // loop_pre_header
      _
    $region3: #{tpu_custom_call.1} parent=1 // loop_header
      %s11 = sphi 0, %s15
      %p12 = scmp.ge.s32.totalorder %s11, 4
      %s21 = sphi 0, %s23
      %s24 = sphi 0, %s21
      %s25 = sphi 0, %s24
      %s41 = sphi 0, %s25
      %s45 = sphi 0, %s45
      %s47 = sphi 0, %s45
      %s48 = sphi 0, %s47
      %s62 = sphi 0, %s48
      %s68 = sphi 0, %s70
      %s71 = sphi 0, %s68
      %s72 = sphi 0, %s71
      %s88 = sphi 0, %s72
    $region4: #{tpu_custom_call.1} parent=1 // loop_header_branch
      %14 = sbr.rel (%p12) target = $region8
    $region5: #{tpu_custom_call.1} parent=1 // loop_body
      %s16 = ssub.s32 %s11, 1
      %s17 = ssub.s32 %s11, 2
      %s18 = sadd.s32 %s11, 1
      %s19 = ssub.s32 %s11, %s18
      %p20 = scmp.eq.s32.totalorder %s19, 0
      %s22 = sadd.s32 %s21, 1
      %s23 = scalar_select %p20, %s21, %s22
      %p26 = pneg %p20
      %p27 = scmp.eq.s32.totalorder %s11, 1
      %p28 = por %p26, %p27
      %p29 = scmp.ne.s32.totalorder %s21, %s24
      %p30 = scmp.eq.s32.totalorder %s11, 0
      %p31 = por %p29, %p30
      %p32 = scmp.ne.s32.totalorder %s21, %s24
      %p33 = scmp.eq.s32.totalorder %s16, 1
      %p34 = por %p32, %p33
      %p35 = scmp.ne.s32.totalorder %s24, %s25
      %p36 = scmp.eq.s32.totalorder %s16, 0
      %p37 = por %p35, %p36
      %p38 = scmp.ne.s32.totalorder %s24, %s25
      %p39 = scmp.eq.s32.totalorder %s17, 1
      %p40 = por %p38, %p39
      %p42 = scmp.ne.s32.totalorder %s25, %s41
      %p43 = scmp.eq.s32.totalorder %s17, 0
      %p44 = por %p42, %p43
      %s46 = sadd.s32 %s45, 1
      %p49 = scmp.eq.s32.totalorder %s11, 1
      %p50 = scmp.ne.s32.totalorder %s45, %s47
      %p51 = scmp.eq.s32.totalorder %s11, 0
      %p52 = por %p50, %p51
      %p53 = scmp.ne.s32.totalorder %s45, %s47
      %p54 = scmp.eq.s32.totalorder %s16, 1
      %p55 = por %p53, %p54
      %p56 = scmp.ne.s32.totalorder %s47, %s48
      %p57 = scmp.eq.s32.totalorder %s16, 0
      %p58 = por %p56, %p57
      %p59 = scmp.ne.s32.totalorder %s47, %s48
      %p60 = scmp.eq.s32.totalorder %s17, 1
      %p61 = por %p59, %p60
      %p63 = scmp.ne.s32.totalorder %s48, %s62
      %p64 = scmp.eq.s32.totalorder %s17, 0
      %p65 = por %p63, %p64
      %s66 = ssub.s32 %s11, %s18
      %p67 = scmp.eq.s32.totalorder %s66, 0
      %s69 = sadd.s32 %s68, 1
      %s70 = scalar_select %p67, %s68, %s69
      %p73 = pneg %p67
      %p74 = scmp.eq.s32.totalorder %s11, 1
      %p75 = por %p73, %p74
      %p76 = scmp.ne.s32.totalorder %s68, %s71
      %p77 = scmp.eq.s32.totalorder %s11, 0
      %p78 = por %p76, %p77
      %p79 = scmp.ne.s32.totalorder %s68, %s71
      %p80 = scmp.eq.s32.totalorder %s16, 1
      %p81 = por %p79, %p80
      %p82 = scmp.ne.s32.totalorder %s71, %s72
      %p83 = scmp.eq.s32.totalorder %s16, 0
      %p84 = por %p82, %p83
      %p85 = scmp.ne.s32.totalorder %s71, %s72
      %p86 = scmp.eq.s32.totalorder %s17, 1
      %p87 = por %p85, %p86
      %p89 = scmp.ne.s32.totalorder %s72, %s88
      %p90 = scmp.eq.s32.totalorder %s17, 0
      %p91 = por %p89, %p90
      %p92 = scmp.le.s32.totalorder 1, %s11
      %p93 = scmp.lt.s32.totalorder %s11, 3
      %p94 = pnand %p92, %p93
      %p95 = pneg %p94
      // Predicated region
      $region9: #{tpu_custom_call.1} parent=5 // pred_check
        _
      $region10: #{tpu_custom_call.1} parent=5 // pred_check_branch
        %97 = sbr.rel (%p94) target = $region12
      $region11: #{tpu_custom_call.1} parent=5 // pred_region
        %s98 = ssub.s32 %s11, 1
        // Predicated region
        $region13: #{tpu_custom_call.1} parent=11 // pred_check
          %p99 = pneg %p58
        $region14: #{tpu_custom_call.1} parent=11 // pred_check_branch
          %101 = sbr.rel (%p99) target = $region16
        $region15: #{tpu_custom_call.1} parent=11 // pred_region
          _
        $region16: #{tpu_custom_call.1} parent=11 // pred_fallthru
          _
      $region12: #{tpu_custom_call.1} parent=5 // pred_fallthru
        _
      %p102 = scmp.lt.s32.totalorder %s11, 2
      // Predicated region
      $region17: #{tpu_custom_call.1} parent=5 // pred_check
        %p103 = pneg %p102
      $region18: #{tpu_custom_call.1} parent=5 // pred_check_branch
        %105 = sbr.rel (%p103) target = $region20
      $region19: #{tpu_custom_call.1} parent=5 // pred_region
        // Predicated region
        $region21: #{tpu_custom_call.1} parent=19 // pred_check
          %p106 = pneg %p31
        $region22: #{tpu_custom_call.1} parent=19 // pred_check_branch
          %108 = sbr.rel (%p106) target = $region24
        $region23: #{tpu_custom_call.1} parent=19 // pred_region
          %p109 = scmp.lt.s32.totalorder %s11, 1
          %s110 = scalar_select %p109, %s11, 1
          %s111 = smul.addr %s110, 8
          %s112 = scalar_lea.vmem %s0, %s111
        $region24: #{tpu_custom_call.1} parent=19 // pred_fallthru
          _
      $region20: #{tpu_custom_call.1} parent=5 // pred_fallthru
        _
      %p113 = scmp.le.s32.totalorder 1, %s11
      %p114 = scmp.lt.s32.totalorder %s11, 3
      %p115 = pnand %p113, %p114
      %p116 = pneg %p115
      // Predicated region
      $region25: #{tpu_custom_call.1} parent=5 // pred_check
        _
      $region26: #{tpu_custom_call.1} parent=5 // pred_check_branch
        %118 = sbr.rel (%p115) target = $region28
      $region27: #{tpu_custom_call.1} parent=5 // pred_region
        %s119 = ssub.s32 %s11, 1
        %p120 = scmp.lt.s32.totalorder %s16, 1
        %s121 = scalar_select %p120, %s16, 1
        %s122 = smul.addr %s121, 8
        %s123 = scalar_lea.vmem %s0, %s122
        %p124 = pneg %p37
        %p125 = pneg %p34
        %p126 = pneg %p58
        %p127 = pneg %p55
        %p128 = pneg %p84
        %p129 = pneg %p81
        %s130 = sand.u32 %s71, 1
        %s131 = scalar_lea.sflag [#allocation3], %s130
        %s132 = sand.u32 %s71, 1
        %s133 = smul.addr %s132, 8
        %s134 = scalar_lea.vmem [#allocation2], %s133
        %p135 = scmp.lt.s32.totalorder %s16, 1
        %s136 = scalar_select %p135, %s16, 1
        %s137 = smul.addr %s136, 8
        %s138 = scalar_lea.vmem %s0, %s137
        %v139 = vld [vmem:[%s138] sm:$0xff]
        %vm140 = vcmp.gt.s32.totalorder %v139, 0
        %v141 = vsel %vm140, %v139, 0
        %vm142 = vcmp.lt.s32.totalorder %v141, 3
        %v143 = vsel %vm142, %v141, 3
        %v144 = vlaneseq
        %v145 = vand.u32 %v144, 127
        %146 = vset.pattern.permute.xlu0 0
        %147 = vperm.xlu0 %146, %v143
        %v148 = vpop.permute.xlu0 %147
        %vm149 = vcmp.eq.s32.totalorder %v145, %v148
        %v150 = vsel %vm149, 1, 0
        %v151 = vcvt.s32.f32 %v150
        %v152 = vld [vmem:[%s1] sm:$0xf]
        %vm153 = vcmask 31744
        %v155 = vsel %vm153, %v151, 0
        %vm157 = vcmask 1043456
        %v159 = vsel %vm157, %v152, 0
        %161 = vmatpush.msra.mxu0 0.0
        %162 = vmatpush.msra.mxu0 0.0
        %163 = vmatpush.msra.mxu0 0.0
        %164 = vmatpush.msra.mxu0 0.0
        %165 = vmatpush.msra.mxu0 0.0
        %166 = vmatpush.msra.mxu0 0.0
        %167 = vmatpush.msra.mxu0 0.0
        %168 = vmatpush.msra.mxu0 0.0
        %169 = vmatpush.msra.mxu0 0.0
        %170 = vmatpush.msra.mxu0 0.0
        %171 = vmatpush.msra.mxu0 0.0
        %172 = vmatpush.msra.mxu0 0.0
        %173 = vmatpush.msra.mxu0 0.0
        %174 = vmatpush.msra.mxu0 0.0
        %175 = vmatpush.msra.mxu0 0.0
        %176 = vmatpush.msra.mxu0 %v159
        %177 = vmatmul.f32.gmra.mxu0 %v155
        %v178 = vpop.f32.mrf.mxu0
        %v179 = vadd.f32 0.0, %v178
        %180 = vdwg.mxu0
        %181 = vst [vmem:[%s134] sm:$0xff] %v179
        %s182 = sand.u32 %s71, 1
        %s183 = scalar_lea.sflag [#allocation3], %s182
        %s184 = sand.u32 %s71, 1
        %s185 = smul.addr %s184, 8
        %s186 = scalar_lea.vmem [#allocation2], %s185
        // Predicated region
        $region29: #{tpu_custom_call.1} parent=27 // pred_check
          %p187 = pneg %p81
        $region30: #{tpu_custom_call.1} parent=27 // pred_check_branch
          %189 = sbr.rel (%p187) target = $region32
        $region31: #{tpu_custom_call.1} parent=27 // pred_region
          %191 = vsyncadd %s183, 0
          %s192 = smul.addr %s16, 8
          %s193 = scalar_lea.hbm %s2, %s192
          %s195 = sshll.u32 %s186, 4
          %s196 = int_to_ptr.vmem [resolvable:$true] %s195
          %s197 = sshll.u32 %s193, 4
          %s198 = int_to_ptr.hbm [resolvable:$true] %s197
          %200 = dma.vmem_to_hbm [thread:$0]  %s196, 128, %s198, %s183
        $region32: #{tpu_custom_call.1} parent=27 // pred_fallthru
          _
      $region28: #{tpu_custom_call.1} parent=5 // pred_fallthru
        _
      %p201 = scmp.le.s32.totalorder 2, %s11
      // Predicated region
      $region33: #{tpu_custom_call.1} parent=5 // pred_check
        %p202 = pneg %p201
      $region34: #{tpu_custom_call.1} parent=5 // pred_check_branch
        %204 = sbr.rel (%p202) target = $region36
      $region35: #{tpu_custom_call.1} parent=5 // pred_region
        %s205 = ssub.s32 %s11, 2
        // Predicated region
        $region37: #{tpu_custom_call.1} parent=35 // pred_check
          %p206 = pneg %p87
        $region38: #{tpu_custom_call.1} parent=35 // pred_check_branch
          %208 = sbr.rel (%p206) target = $region40
        $region39: #{tpu_custom_call.1} parent=35 // pred_region
          %s209 = sand.u32 %s72, 1
          %s210 = scalar_lea.sflag [#allocation3], %s209
          %s211 = sand.u32 %s72, 1
          %s212 = smul.addr %s211, 8
          %s213 = scalar_lea.vmem [#allocation2], %s212
          %215 = dma.done %s210, 128
        $region40: #{tpu_custom_call.1} parent=35 // pred_fallthru
          _
      $region36: #{tpu_custom_call.1} parent=5 // pred_fallthru
        _
    $region6: #{tpu_custom_call.1} parent=1 // loop_footer
      %s15 = sadd.s32 1, %s11
    $region7: #{tpu_custom_call.1} parent=1 // loop_footer_branch
      %10 = sbr.rel target = $region3
    $region8: #{tpu_custom_call.1} parent=1 // loop_exit
      _
    %216 = vsyncpa [#allocation3], 1
    %s217 = scalar_lea.sflag [#allocation3], 1
    %218 = vsyncpa %s217, 1

</llo_original>
